<compile_context>
chip_gen: v5e
topology: v5e:2x2
jax: 0.10.0
libtpu: 0.0.40
codegen_flags: <defaults>
</compile_context>

<pallas_src>
import functools

import numpy as np

import jax
import jax.numpy as jnp
from jax import lax
from jax.experimental import pallas as pl
from jax.experimental.pallas import tpu as pltpu


# ------------------------------- helpers ----------------------------------- #

def _tap_masks(H, W, dtype):
    """(9, 1, H*W) masks: mask[k, 0, p]=1 iff tap (dy,dx)=(k//3-1, k%3-1) of
    output position p is inside the image.  Built with numpy (compile-time
    constant) and passed to the kernel as a regular operand."""
    m = np.ones((9, 1, H, W), np.float32)
    for dy in (-1, 0, 1):
        for dx in (-1, 0, 1):
            k = (dy + 1) * 3 + (dx + 1)
            if dy > 0:
                m[k, :, H - dy:, :] = 0.0
            if dy < 0:
                m[k, :, :-dy, :] = 0.0
            if dx > 0:
                m[k, :, :, W - dx:] = 0.0
            if dx < 0:
                m[k, :, :, :-dx] = 0.0
    return jnp.asarray(m.reshape(9, 1, H * W), dtype)


# ------------------------------ Pallas kernel ------------------------------- #

def _bottleneck_kernel(x_ref, w1_ref, b1_ref, w2_ref, m2_ref, b2_ref,
                       w3_ref, b3_ref, o_ref, *, H, W):
    # x_ref : (1, Cin, H*W) f32   input image (also the residual, kept f32)
    # w1    : (Cmid, Cin)         1x1 conv, BN1 scale folded (compute dtype)
    # b1    : (Cmid, 1)     f32   folded BN1 bias
    # w2    : (9, Cmid, Cmid)     3x3 conv taps, k = ky*3+kx, BN2 folded
    # m2    : (9, 1, H*W)         in-bounds masks for each tap (compute dtype)
    # b2    : (Cmid, 1)     f32
    # w3    : (Cout, Cmid)        1x1 conv, BN3 folded
    # b3    : (Cout, 1)     f32
    # o_ref : (1, Cout, H*W) f32
    f32 = jnp.float32
    cdt = w1_ref.dtype                      # matmul compute dtype (f32 / bf16)

    x = x_ref[0]                            # (Cin, HW), f32 residual source

    # conv1 (1x1) + bn1 + relu :  (Cmid, Cin) @ (Cin, HW)
    h1 = jnp.dot(w1_ref[...], x.astype(cdt), preferred_element_type=f32)
    h1 = jnp.maximum(h1 + b1_ref[...], 0.0)

    # conv2 (3x3, stride=1, pad=1) + bn2 + relu:
    # 9 accumulated MXU matmuls over lane-rotated views of h1; wrapped values
    # land exactly where the precomputed mask is 0.  No im2col, no zero-concat
    # copies; h1 is cast to the compute dtype once.
    h1c = h1.astype(cdt)
    # Center tap (dy=dx=0, k=4) initializes the accumulator (no zeros + add).
    acc = jnp.dot(w2_ref[4], h1c, preferred_element_type=f32)
    for dy in (-1, 0, 1):
        for dx in (-1, 0, 1):
            if dy == 0 and dx == 0:
                continue
            s = dy * W + dx                     # flat spatial shift of this tap
            k = (dy + 1) * 3 + (dx + 1)
            shifted = jnp.roll(h1c, -s, axis=1)  # lane-axis rotate
            tap = shifted * m2_ref[k]            # (Cmid, HW) * (1, HW)
            acc = acc + jnp.dot(w2_ref[k], tap, preferred_element_type=f32)
    h2 = jnp.maximum(acc + b2_ref[...], 0.0)

    # conv3 (1x1) + bn3 + relu, then residual add + final relu.
    y = jnp.dot(w3_ref[...], h2.astype(cdt), preferred_element_type=f32)
    y = jnp.maximum(y + b3_ref[...], 0.0)       # ReLU before add (given module)
    y = jnp.maximum(y + x, 0.0)                 # residual in full f32 precision
    o_ref[0] = y.astype(o_ref.dtype)


# --------------------------- Bottleneck forward ----------------------------- #

@jax.jit
def bottleneck_forward(x_nchw, packed):
    """Pallas-backed Bottleneck forward. x_nchw: (N, Cin, H, W) float32."""
    N, Cin, H, W = x_nchw.shape
    Cmid = packed["w1"].shape[0]
    Cout = packed["w3"].shape[0]
    assert Cin == Cout, "downsample=None requires in_channels == out_channels*expansion"
    assert H >= 2 and W >= 2
    HW = H * W
    f32 = jnp.float32
    cdt = packed["w1"].dtype

    # NCHW kept end-to-end; only the spatial dims are flattened so the last
    # (lane) axis is H*W.  No channel padding, no transposes, no output slice.
    x3 = x_nchw.reshape(N, Cin, HW)
    masks = _tap_masks(H, W, cdt)

    # Advisory cost estimate for XLA's scheduler.
    flops = 2 * N * HW * (Cin * Cmid + 9 * Cmid * Cmid + Cmid * Cout)
    w_elems = Cin * Cmid + 9 * Cmid * Cmid + Cmid * Cout
    bytes_accessed = 4 * N * HW * (Cin + Cout) + 4 * (w_elems + 2 * Cmid + Cout)

    # Per-step VMEM: double-buffered in/out image blocks + resident weights +
    # slack for in-kernel temporaries; capped at 48 MiB to leave headroom under
    # v7x's 64 MiB physical VMEM.  (At real ResNet widths the constant-index
    # weight blocks should additionally be single-buffered.)
    itm = jnp.dtype(cdt).itemsize
    step_bytes = (2 * HW * (Cin + Cout) * 4
                  + 2 * (w_elems + 9 * HW) * itm
                  + 8 * HW * max(Cin, Cmid, Cout) * 4)
    vmem_limit = int(min(max(2 * step_bytes, 16 * 1024 * 1024), 48 * 1024 * 1024))

    kernel = functools.partial(_bottleneck_kernel, H=H, W=W)
    out3 = pl.pallas_call(
        kernel,
        out_shape=jax.ShapeDtypeStruct((N, Cout, HW), f32),
        grid=(N,),
        in_specs=[
            pl.BlockSpec((1, Cin, HW), lambda n: (n, 0, 0)),       # x
            pl.BlockSpec((Cmid, Cin), lambda n: (0, 0)),           # w1
            pl.BlockSpec((Cmid, 1), lambda n: (0, 0)),             # b1
            pl.BlockSpec((9, Cmid, Cmid), lambda n: (0, 0, 0)),    # w2 taps
            pl.BlockSpec((9, 1, HW), lambda n: (0, 0, 0)),         # tap masks
            pl.BlockSpec((Cmid, 1), lambda n: (0, 0)),             # b2
            pl.BlockSpec((Cout, Cmid), lambda n: (0, 0)),          # w3
            pl.BlockSpec((Cout, 1), lambda n: (0, 0)),             # b3
        ],
        out_specs=pl.BlockSpec((1, Cout, HW), lambda n: (n, 0, 0)),
        compiler_params=pltpu.CompilerParams(
            dimension_semantics=("parallel",),
            vmem_limit_bytes=vmem_limit),
        cost_estimate=pl.CostEstimate(flops=flops, transcendentals=0,
                                      bytes_accessed=bytes_accessed),
    )(x3, packed["w1"], packed["b1"], packed["w2"], masks, packed["b2"],
      packed["w3"], packed["b3"])

    return out3.reshape(N, Cout, H, W)


# ------------------------------ Parameters ---------------------------------- #

def make_params(key, in_channels, out_channels, expansion=4):
    """PyTorch-layout parameters: conv weights OIHW + BatchNorm2d stats."""
    Cin, Cmid, Cout = in_channels, out_channels, out_channels * expansion
    ks = jax.random.split(key, 15)

    def bn(kg, kb, km, kv, C):
        return dict(
            gamma=1.0 + 0.1 * jax.random.normal(kg, (C,), jnp.float32),
            beta=0.1 * jax.random.normal(kb, (C,), jnp.float32),
            mean=0.1 * jax.random.normal(km, (C,), jnp.float32),
            var=1.0 + 0.1 * jax.random.uniform(kv, (C,), jnp.float32))

    return dict(
        conv1_w=jax.random.normal(ks[0], (Cmid, Cin, 1, 1), jnp.float32) / jnp.sqrt(1.0 * Cin),
        conv2_w=jax.random.normal(ks[1], (Cmid, Cmid, 3, 3), jnp.float32) / jnp.sqrt(9.0 * Cmid),
        conv3_w=jax.random.normal(ks[2], (Cout, Cmid, 1, 1), jnp.float32) / jnp.sqrt(1.0 * Cmid),
        bn1=bn(ks[3], ks[4], ks[5], ks[6], Cmid),
        bn2=bn(ks[7], ks[8], ks[9], ks[10], Cmid),
        bn3=bn(ks[11], ks[12], ks[13], ks[14], Cout))


def prepare_params(params, matmul_dtype=jnp.float32, eps=1e-5):
    """Fold eval-mode BN into the conv weights and pack for the kernel.

    Hoisted out of the per-call jit: call once, reuse the packed weights for
    every forward.  matmul_dtype=jnp.bfloat16 is the production path on
    v5e/v6e/v7x; f32 is used in the test below for a tight tolerance."""
    def fold(bn):
        scale = bn["gamma"] / jnp.sqrt(bn["var"] + eps)
        return scale, bn["beta"] - bn["mean"] * scale

    s1, b1 = fold(params["bn1"])
    s2, b2 = fold(params["bn2"])
    s3, b3 = fold(params["bn3"])

    Cmid = params["conv1_w"].shape[0]
    f32 = jnp.float32
    w1 = (s1[:, None] * params["conv1_w"][:, :, 0, 0]).astype(matmul_dtype)
    # (Cout, Cin, 3, 3) -> (9, Cout, Cin) with tap index k = ky*3 + kx.
    w2 = jnp.transpose(params["conv2_w"], (2, 3, 0, 1)).reshape(9, Cmid, Cmid)
    w2 = (s2[None, :, None] * w2).astype(matmul_dtype)
    w3 = (s3[:, None] * params["conv3_w"][:, :, 0, 0]).astype(matmul_dtype)

    return dict(w1=w1, b1=b1[:, None].astype(f32),
                w2=w2, b2=b2[:, None].astype(f32),
                w3=w3, b3=b3[:, None].astype(f32))


# ------------------------- Pure-JAX reference (NCHW) ------------------------ #

def reference_forward(x_nchw, params, eps=1e-5):
    def conv(x, w_oihw, pad):
        return lax.conv_general_dilated(
            x, w_oihw, window_strides=(1, 1),
            padding=[(pad, pad), (pad, pad)],
            dimension_numbers=("NCHW", "OIHW", "NCHW"),
            precision=lax.Precision.HIGHEST)

    def bn(x, p):
        s = p["gamma"] / jnp.sqrt(p["var"] + eps)
        b = p["beta"] - p["mean"] * s
        return x * s[None, :, None, None] + b[None, :, None, None]

    relu = lambda t: jnp.maximum(t, 0.0)
    shortcut = x_nchw
    out = relu(bn(conv(x_nchw, params["conv1_w"], 0), params["bn1"]))
    out = relu(bn(conv(out, params["conv2_w"], 1), params["bn2"]))
    out = relu(bn(conv(out, params["conv3_w"], 0), params["bn3"]))
    return relu(out + shortcut)   # given module: relu(bn3) happens before the add


# ----------------------------------- main ----------------------------------- #

if __name__ == "__main__":
    N, H, W = 2, 16, 16
    out_channels = 4
    in_channels = out_channels * 4   # downsample=None => Cin == Cout*expansion

    key = jax.random.PRNGKey(0)
    k_x, k_p = jax.random.split(key)
    x = jax.random.normal(k_x, (N, in_channels, H, W), jnp.float32)
    params = make_params(k_p, in_channels, out_channels)
    packed = prepare_params(params)          # weight fold/pack done ONCE

    out = jax.block_until_ready(bottleneck_forward(x, packed))
    ref = jax.block_until_ready(reference_forward(x, params))

    assert out.shape == ref.shape == (N, in_channels, H, W)
    max_err = float(jnp.max(jnp.abs(out - ref)))
    assert bool(jnp.allclose(out, ref, rtol=5e-3, atol=5e-3)), max_err

    print("KERNEL_OK")
</pallas_src>

<mosaic_0001>
module attributes {stable_mosaic.version = 11 : i64} {
  func.func @_bottleneck_kernel(%arg0: i32, %arg1: memref<1x16x256xf32, #tpu.memory_space<vmem>>, %arg2: memref<4x16xf32, #tpu.memory_space<vmem>>, %arg3: memref<4x1xf32, #tpu.memory_space<vmem>>, %arg4: memref<9x4x4xf32, #tpu.memory_space<vmem>>, %arg5: memref<9x1x256xf32, #tpu.memory_space<vmem>>, %arg6: memref<4x1xf32, #tpu.memory_space<vmem>>, %arg7: memref<16x4xf32, #tpu.memory_space<vmem>>, %arg8: memref<16x1xf32, #tpu.memory_space<vmem>>, %arg9: memref<1x16x256xf32, #tpu.memory_space<vmem>>) attributes {dimension_semantics = [#tpu.dimension_semantics<parallel>], iteration_bounds = array<i64: 2>, scalar_prefetch = 0 : i64, scratch_operands = 0 : i64, tpu.core_type = #tpu.core_type<tc>, window_params = [{transform_indices = @transform_0, window_bounds = array<i64: 1, 16, 256>}, {pipeline_mode = #tpu.pipeline_mode<synchronous>, transform_indices = @transform_1, window_bounds = array<i64: 4, 16>}, {pipeline_mode = #tpu.pipeline_mode<synchronous>, transform_indices = @transform_2, window_bounds = array<i64: 4, 1>}, {pipeline_mode = #tpu.pipeline_mode<synchronous>, transform_indices = @transform_3, window_bounds = array<i64: 9, 4, 4>}, {pipeline_mode = #tpu.pipeline_mode<synchronous>, transform_indices = @transform_4, window_bounds = array<i64: 9, 1, 256>}, {pipeline_mode = #tpu.pipeline_mode<synchronous>, transform_indices = @transform_5, window_bounds = array<i64: 4, 1>}, {pipeline_mode = #tpu.pipeline_mode<synchronous>, transform_indices = @transform_6, window_bounds = array<i64: 16, 4>}, {pipeline_mode = #tpu.pipeline_mode<synchronous>, transform_indices = @transform_7, window_bounds = array<i64: 16, 1>}, {transform_indices = @transform_8, window_bounds = array<i64: 1, 16, 256>}]} {
    %c0 = arith.constant 0 : index
    %c0_0 = arith.constant 0 : index
    %c0_1 = arith.constant 0 : index
    %0 = vector.load %arg1[%c0, %c0_0, %c0_1] : memref<1x16x256xf32, #tpu.memory_space<vmem>>, vector<1x16x256xf32>
    %1 = vector.shape_cast %0 : vector<1x16x256xf32> to vector<16x256xf32>
    %c0_2 = arith.constant 0 : index
    %c0_3 = arith.constant 0 : index
    %2 = vector.load %arg2[%c0_2, %c0_3] : memref<4x16xf32, #tpu.memory_space<vmem>>, vector<4x16xf32>
    %cst = arith.constant dense<0.000000e+00> : vector<4x256xf32>
    %3 = tpu.matmul %2, %1, %cst {dimension_numbers = #tpu.dot_dimension_numbers<[1], [0], [0], [1], [0, 0, 1, 1], [], []>} : vector<4x16xf32>, vector<16x256xf32>, vector<4x256xf32> -> vector<4x256xf32>
    %c0_4 = arith.constant 0 : index
    %c0_5 = arith.constant 0 : index
    %4 = vector.load %arg3[%c0_4, %c0_5] : memref<4x1xf32, #tpu.memory_space<vmem>>, vector<4x1xf32>
    %5 = vector.broadcast %4 : vector<4x1xf32> to vector<4x256xf32>
    %6 = arith.addf %3, %5 : vector<4x256xf32>
    %cst_6 = arith.constant 0.000000e+00 : f32
    %7 = vector.broadcast %cst_6 : f32 to vector<4x256xf32>
    %8 = arith.maximumf %6, %7 : vector<4x256xf32>
    %c4 = arith.constant 4 : index
    %c0_7 = arith.constant 0 : index
    %c0_8 = arith.constant 0 : index
    %9 = vector.load %arg4[%c4, %c0_7, %c0_8] : memref<9x4x4xf32, #tpu.memory_space<vmem>>, vector<1x4x4xf32>
    %10 = vector.shape_cast %9 : vector<1x4x4xf32> to vector<4x4xf32>
    %cst_9 = arith.constant dense<0.000000e+00> : vector<4x256xf32>
    %11 = tpu.matmul %10, %8, %cst_9 {dimension_numbers = #tpu.dot_dimension_numbers<[1], [0], [0], [1], [0, 0, 1, 1], [], []>} : vector<4x4xf32>, vector<4x256xf32>, vector<4x256xf32> -> vector<4x256xf32>
    %12 = vector.extract_strided_slice %8 {offsets = [0, 239], sizes = [4, 17], strides = [1, 1]} : vector<4x256xf32> to vector<4x17xf32>
    %13 = vector.extract_strided_slice %8 {offsets = [0, 0], sizes = [4, 239], strides = [1, 1]} : vector<4x256xf32> to vector<4x239xf32>
    %14 = tpu.concatenate %12, %13 in 1 : vector<4x17xf32>, vector<4x239xf32> -> vector<4x256xf32>
    %c0_10 = arith.constant 0 : index
    %c0_11 = arith.constant 0 : index
    %c0_12 = arith.constant 0 : index
    %15 = vector.load %arg5[%c0_10, %c0_11, %c0_12] : memref<9x1x256xf32, #tpu.memory_space<vmem>>, vector<1x1x256xf32>
    %16 = vector.shape_cast %15 : vector<1x1x256xf32> to vector<1x256xf32>
    %17 = vector.broadcast %16 : vector<1x256xf32> to vector<4x256xf32>
    %18 = arith.mulf %14, %17 : vector<4x256xf32>
    %c0_13 = arith.constant 0 : index
    %c0_14 = arith.constant 0 : index
    %c0_15 = arith.constant 0 : index
    %19 = vector.load %arg4[%c0_13, %c0_14, %c0_15] : memref<9x4x4xf32, #tpu.memory_space<vmem>>, vector<1x4x4xf32>
    %20 = vector.shape_cast %19 : vector<1x4x4xf32> to vector<4x4xf32>
    %cst_16 = arith.constant dense<0.000000e+00> : vector<4x256xf32>
    %21 = tpu.matmul %20, %18, %cst_16 {dimension_numbers = #tpu.dot_dimension_numbers<[1], [0], [0], [1], [0, 0, 1, 1], [], []>} : vector<4x4xf32>, vector<4x256xf32>, vector<4x256xf32> -> vector<4x256xf32>
    %22 = arith.addf %11, %21 : vector<4x256xf32>
    %23 = vector.extract_strided_slice %8 {offsets = [0, 240], sizes = [4, 16], strides = [1, 1]} : vector<4x256xf32> to vector<4x16xf32>
    %24 = vector.extract_strided_slice %8 {offsets = [0, 0], sizes = [4, 240], strides = [1, 1]} : vector<4x256xf32> to vector<4x240xf32>
    %25 = tpu.concatenate %23, %24 in 1 : vector<4x16xf32>, vector<4x240xf32> -> vector<4x256xf32>
    %c1 = arith.constant 1 : index
    %c0_17 = arith.constant 0 : index
    %c0_18 = arith.constant 0 : index
    %26 = vector.load %arg5[%c1, %c0_17, %c0_18] : memref<9x1x256xf32, #tpu.memory_space<vmem>>, vector<1x1x256xf32>
    %27 = vector.shape_cast %26 : vector<1x1x256xf32> to vector<1x256xf32>
    %28 = vector.broadcast %27 : vector<1x256xf32> to vector<4x256xf32>
    %29 = arith.mulf %25, %28 : vector<4x256xf32>
    %c1_19 = arith.constant 1 : index
    %c0_20 = arith.constant 0 : index
    %c0_21 = arith.constant 0 : index
    %30 = vector.load %arg4[%c1_19, %c0_20, %c0_21] : memref<9x4x4xf32, #tpu.memory_space<vmem>>, vector<1x4x4xf32>
    %31 = vector.shape_cast %30 : vector<1x4x4xf32> to vector<4x4xf32>
    %cst_22 = arith.constant dense<0.000000e+00> : vector<4x256xf32>
    %32 = tpu.matmul %31, %29, %cst_22 {dimension_numbers = #tpu.dot_dimension_numbers<[1], [0], [0], [1], [0, 0, 1, 1], [], []>} : vector<4x4xf32>, vector<4x256xf32>, vector<4x256xf32> -> vector<4x256xf32>
    %33 = arith.addf %22, %32 : vector<4x256xf32>
    %34 = vector.extract_strided_slice %8 {offsets = [0, 241], sizes = [4, 15], strides = [1, 1]} : vector<4x256xf32> to vector<4x15xf32>
    %35 = vector.extract_strided_slice %8 {offsets = [0, 0], sizes = [4, 241], strides = [1, 1]} : vector<4x256xf32> to vector<4x241xf32>
    %36 = tpu.concatenate %34, %35 in 1 : vector<4x15xf32>, vector<4x241xf32> -> vector<4x256xf32>
    %c2 = arith.constant 2 : index
    %c0_23 = arith.constant 0 : index
    %c0_24 = arith.constant 0 : index
    %37 = vector.load %arg5[%c2, %c0_23, %c0_24] : memref<9x1x256xf32, #tpu.memory_space<vmem>>, vector<1x1x256xf32>
    %38 = vector.shape_cast %37 : vector<1x1x256xf32> to vector<1x256xf32>
    %39 = vector.broadcast %38 : vector<1x256xf32> to vector<4x256xf32>
    %40 = arith.mulf %36, %39 : vector<4x256xf32>
    %c2_25 = arith.constant 2 : index
    %c0_26 = arith.constant 0 : index
    %c0_27 = arith.constant 0 : index
    %41 = vector.load %arg4[%c2_25, %c0_26, %c0_27] : memref<9x4x4xf32, #tpu.memory_space<vmem>>, vector<1x4x4xf32>
    %42 = vector.shape_cast %41 : vector<1x4x4xf32> to vector<4x4xf32>
    %cst_28 = arith.constant dense<0.000000e+00> : vector<4x256xf32>
    %43 = tpu.matmul %42, %40, %cst_28 {dimension_numbers = #tpu.dot_dimension_numbers<[1], [0], [0], [1], [0, 0, 1, 1], [], []>} : vector<4x4xf32>, vector<4x256xf32>, vector<4x256xf32> -> vector<4x256xf32>
    %44 = arith.addf %33, %43 : vector<4x256xf32>
    %45 = vector.extract_strided_slice %8 {offsets = [0, 255], sizes = [4, 1], strides = [1, 1]} : vector<4x256xf32> to vector<4x1xf32>
    %46 = vector.extract_strided_slice %8 {offsets = [0, 0], sizes = [4, 255], strides = [1, 1]} : vector<4x256xf32> to vector<4x255xf32>
    %47 = tpu.concatenate %45, %46 in 1 : vector<4x1xf32>, vector<4x255xf32> -> vector<4x256xf32>
    %c3 = arith.constant 3 : index
    %c0_29 = arith.constant 0 : index
    %c0_30 = arith.constant 0 : index
    %48 = vector.load %arg5[%c3, %c0_29, %c0_30] : memref<9x1x256xf32, #tpu.memory_space<vmem>>, vector<1x1x256xf32>
    %49 = vector.shape_cast %48 : vector<1x1x256xf32> to vector<1x256xf32>
    %50 = vector.broadcast %49 : vector<1x256xf32> to vector<4x256xf32>
    %51 = arith.mulf %47, %50 : vector<4x256xf32>
    %c3_31 = arith.constant 3 : index
    %c0_32 = arith.constant 0 : index
    %c0_33 = arith.constant 0 : index
    %52 = vector.load %arg4[%c3_31, %c0_32, %c0_33] : memref<9x4x4xf32, #tpu.memory_space<vmem>>, vector<1x4x4xf32>
    %53 = vector.shape_cast %52 : vector<1x4x4xf32> to vector<4x4xf32>
    %cst_34 = arith.constant dense<0.000000e+00> : vector<4x256xf32>
    %54 = tpu.matmul %53, %51, %cst_34 {dimension_numbers = #tpu.dot_dimension_numbers<[1], [0], [0], [1], [0, 0, 1, 1], [], []>} : vector<4x4xf32>, vector<4x256xf32>, vector<4x256xf32> -> vector<4x256xf32>
    %55 = arith.addf %44, %54 : vector<4x256xf32>
    %56 = vector.extract_strided_slice %8 {offsets = [0, 1], sizes = [4, 255], strides = [1, 1]} : vector<4x256xf32> to vector<4x255xf32>
    %57 = vector.extract_strided_slice %8 {offsets = [0, 0], sizes = [4, 1], strides = [1, 1]} : vector<4x256xf32> to vector<4x1xf32>
    %58 = tpu.concatenate %56, %57 in 1 : vector<4x255xf32>, vector<4x1xf32> -> vector<4x256xf32>
    %c5 = arith.constant 5 : index
    %c0_35 = arith.constant 0 : index
    %c0_36 = arith.constant 0 : index
    %59 = vector.load %arg5[%c5, %c0_35, %c0_36] : memref<9x1x256xf32, #tpu.memory_space<vmem>>, vector<1x1x256xf32>
    %60 = vector.shape_cast %59 : vector<1x1x256xf32> to vector<1x256xf32>
    %61 = vector.broadcast %60 : vector<1x256xf32> to vector<4x256xf32>
    %62 = arith.mulf %58, %61 : vector<4x256xf32>
    %c5_37 = arith.constant 5 : index
    %c0_38 = arith.constant 0 : index
    %c0_39 = arith.constant 0 : index
    %63 = vector.load %arg4[%c5_37, %c0_38, %c0_39] : memref<9x4x4xf32, #tpu.memory_space<vmem>>, vector<1x4x4xf32>
    %64 = vector.shape_cast %63 : vector<1x4x4xf32> to vector<4x4xf32>
    %cst_40 = arith.constant dense<0.000000e+00> : vector<4x256xf32>
    %65 = tpu.matmul %64, %62, %cst_40 {dimension_numbers = #tpu.dot_dimension_numbers<[1], [0], [0], [1], [0, 0, 1, 1], [], []>} : vector<4x4xf32>, vector<4x256xf32>, vector<4x256xf32> -> vector<4x256xf32>
    %66 = arith.addf %55, %65 : vector<4x256xf32>
    %67 = vector.extract_strided_slice %8 {offsets = [0, 15], sizes = [4, 241], strides = [1, 1]} : vector<4x256xf32> to vector<4x241xf32>
    %68 = vector.extract_strided_slice %8 {offsets = [0, 0], sizes = [4, 15], strides = [1, 1]} : vector<4x256xf32> to vector<4x15xf32>
    %69 = tpu.concatenate %67, %68 in 1 : vector<4x241xf32>, vector<4x15xf32> -> vector<4x256xf32>
    %c6 = arith.constant 6 : index
    %c0_41 = arith.constant 0 : index
    %c0_42 = arith.constant 0 : index
    %70 = vector.load %arg5[%c6, %c0_41, %c0_42] : memref<9x1x256xf32, #tpu.memory_space<vmem>>, vector<1x1x256xf32>
    %71 = vector.shape_cast %70 : vector<1x1x256xf32> to vector<1x256xf32>
    %72 = vector.broadcast %71 : vector<1x256xf32> to vector<4x256xf32>
    %73 = arith.mulf %69, %72 : vector<4x256xf32>
    %c6_43 = arith.constant 6 : index
    %c0_44 = arith.constant 0 : index
    %c0_45 = arith.constant 0 : index
    %74 = vector.load %arg4[%c6_43, %c0_44, %c0_45] : memref<9x4x4xf32, #tpu.memory_space<vmem>>, vector<1x4x4xf32>
    %75 = vector.shape_cast %74 : vector<1x4x4xf32> to vector<4x4xf32>
    %cst_46 = arith.constant dense<0.000000e+00> : vector<4x256xf32>
    %76 = tpu.matmul %75, %73, %cst_46 {dimension_numbers = #tpu.dot_dimension_numbers<[1], [0], [0], [1], [0, 0, 1, 1], [], []>} : vector<4x4xf32>, vector<4x256xf32>, vector<4x256xf32> -> vector<4x256xf32>
    %77 = arith.addf %66, %76 : vector<4x256xf32>
    %78 = vector.extract_strided_slice %8 {offsets = [0, 16], sizes = [4, 240], strides = [1, 1]} : vector<4x256xf32> to vector<4x240xf32>
    %79 = vector.extract_strided_slice %8 {offsets = [0, 0], sizes = [4, 16], strides = [1, 1]} : vector<4x256xf32> to vector<4x16xf32>
    %80 = tpu.concatenate %78, %79 in 1 : vector<4x240xf32>, vector<4x16xf32> -> vector<4x256xf32>
    %c7 = arith.constant 7 : index
    %c0_47 = arith.constant 0 : index
    %c0_48 = arith.constant 0 : index
    %81 = vector.load %arg5[%c7, %c0_47, %c0_48] : memref<9x1x256xf32, #tpu.memory_space<vmem>>, vector<1x1x256xf32>
    %82 = vector.shape_cast %81 : vector<1x1x256xf32> to vector<1x256xf32>
    %83 = vector.broadcast %82 : vector<1x256xf32> to vector<4x256xf32>
    %84 = arith.mulf %80, %83 : vector<4x256xf32>
    %c7_49 = arith.constant 7 : index
    %c0_50 = arith.constant 0 : index
    %c0_51 = arith.constant 0 : index
    %85 = vector.load %arg4[%c7_49, %c0_50, %c0_51] : memref<9x4x4xf32, #tpu.memory_space<vmem>>, vector<1x4x4xf32>
    %86 = vector.shape_cast %85 : vector<1x4x4xf32> to vector<4x4xf32>
    %cst_52 = arith.constant dense<0.000000e+00> : vector<4x256xf32>
    %87 = tpu.matmul %86, %84, %cst_52 {dimension_numbers = #tpu.dot_dimension_numbers<[1], [0], [0], [1], [0, 0, 1, 1], [], []>} : vector<4x4xf32>, vector<4x256xf32>, vector<4x256xf32> -> vector<4x256xf32>
    %88 = arith.addf %77, %87 : vector<4x256xf32>
    %89 = vector.extract_strided_slice %8 {offsets = [0, 17], sizes = [4, 239], strides = [1, 1]} : vector<4x256xf32> to vector<4x239xf32>
    %90 = vector.extract_strided_slice %8 {offsets = [0, 0], sizes = [4, 17], strides = [1, 1]} : vector<4x256xf32> to vector<4x17xf32>
    %91 = tpu.concatenate %89, %90 in 1 : vector<4x239xf32>, vector<4x17xf32> -> vector<4x256xf32>
    %c8 = arith.constant 8 : index
    %c0_53 = arith.constant 0 : index
    %c0_54 = arith.constant 0 : index
    %92 = vector.load %arg5[%c8, %c0_53, %c0_54] : memref<9x1x256xf32, #tpu.memory_space<vmem>>, vector<1x1x256xf32>
    %93 = vector.shape_cast %92 : vector<1x1x256xf32> to vector<1x256xf32>
    %94 = vector.broadcast %93 : vector<1x256xf32> to vector<4x256xf32>
    %95 = arith.mulf %91, %94 : vector<4x256xf32>
    %c8_55 = arith.constant 8 : index
    %c0_56 = arith.constant 0 : index
    %c0_57 = arith.constant 0 : index
    %96 = vector.load %arg4[%c8_55, %c0_56, %c0_57] : memref<9x4x4xf32, #tpu.memory_space<vmem>>, vector<1x4x4xf32>
    %97 = vector.shape_cast %96 : vector<1x4x4xf32> to vector<4x4xf32>
    %cst_58 = arith.constant dense<0.000000e+00> : vector<4x256xf32>
    %98 = tpu.matmul %97, %95, %cst_58 {dimension_numbers = #tpu.dot_dimension_numbers<[1], [0], [0], [1], [0, 0, 1, 1], [], []>} : vector<4x4xf32>, vector<4x256xf32>, vector<4x256xf32> -> vector<4x256xf32>
    %99 = arith.addf %88, %98 : vector<4x256xf32>
    %c0_59 = arith.constant 0 : index
    %c0_60 = arith.constant 0 : index
    %100 = vector.load %arg6[%c0_59, %c0_60] : memref<4x1xf32, #tpu.memory_space<vmem>>, vector<4x1xf32>
    %101 = vector.broadcast %100 : vector<4x1xf32> to vector<4x256xf32>
    %102 = arith.addf %99, %101 : vector<4x256xf32>
    %cst_61 = arith.constant 0.000000e+00 : f32
    %103 = vector.broadcast %cst_61 : f32 to vector<4x256xf32>
    %104 = arith.maximumf %102, %103 : vector<4x256xf32>
    %c0_62 = arith.constant 0 : index
    %c0_63 = arith.constant 0 : index
    %105 = vector.load %arg7[%c0_62, %c0_63] : memref<16x4xf32, #tpu.memory_space<vmem>>, vector<16x4xf32>
    %cst_64 = arith.constant dense<0.000000e+00> : vector<16x256xf32>
    %106 = tpu.matmul %105, %104, %cst_64 {dimension_numbers = #tpu.dot_dimension_numbers<[1], [0], [0], [1], [0, 0, 1, 1], [], []>} : vector<16x4xf32>, vector<4x256xf32>, vector<16x256xf32> -> vector<16x256xf32>
    %c0_65 = arith.constant 0 : index
    %c0_66 = arith.constant 0 : index
    %107 = vector.load %arg8[%c0_65, %c0_66] : memref<16x1xf32, #tpu.memory_space<vmem>>, vector<16x1xf32>
    %108 = vector.broadcast %107 : vector<16x1xf32> to vector<16x256xf32>
    %109 = arith.addf %106, %108 : vector<16x256xf32>
    %cst_67 = arith.constant 0.000000e+00 : f32
    %110 = vector.broadcast %cst_67 : f32 to vector<16x256xf32>
    %111 = arith.maximumf %109, %110 : vector<16x256xf32>
    %112 = arith.addf %111, %1 : vector<16x256xf32>
    %cst_68 = arith.constant 0.000000e+00 : f32
    %113 = vector.broadcast %cst_68 : f32 to vector<16x256xf32>
    %114 = arith.maximumf %112, %113 : vector<16x256xf32>
    %c0_69 = arith.constant 0 : index
    %c0_70 = arith.constant 0 : index
    %c0_71 = arith.constant 0 : index
    %115 = vector.load %arg9[%c0_69, %c0_70, %c0_71] : memref<1x16x256xf32, #tpu.memory_space<vmem>>, vector<1x16x256xf32>
    %116 = vector.shape_cast %115 : vector<1x16x256xf32> to vector<16x256xf32>
    %117 = vector.shape_cast %114 : vector<16x256xf32> to vector<1x16x256xf32>
    tpu.vector_store %arg9[%c0_69, %c0_70, %c0_71], %117 {strides = array<i32>} : memref<1x16x256xf32, #tpu.memory_space<vmem>>, vector<1x16x256xf32>,
    return
  }
  func.func @transform_0(%arg0: i32) -> (i32, i32, i32) {
    %c0_i32 = arith.constant 0 : i32
    %c0_i32_0 = arith.constant 0 : i32
    %c0_i32_1 = arith.constant 0 : i32
    return %arg0, %c0_i32, %c0_i32_0 : i32, i32, i32
  }
  func.func @transform_1(%arg0: i32) -> (i32, i32) {
    %c0_i32 = arith.constant 0 : i32
    %c0_i32_0 = arith.constant 0 : i32
    %c0_i32_1 = arith.constant 0 : i32
    return %c0_i32, %c0_i32_0 : i32, i32
  }
  func.func @transform_2(%arg0: i32) -> (i32, i32) {
    %c0_i32 = arith.constant 0 : i32
    %c0_i32_0 = arith.constant 0 : i32
    %c0_i32_1 = arith.constant 0 : i32
    return %c0_i32, %c0_i32_0 : i32, i32
  }
  func.func @transform_3(%arg0: i32) -> (i32, i32, i32) {
    %c0_i32 = arith.constant 0 : i32
    %c0_i32_0 = arith.constant 0 : i32
    %c0_i32_1 = arith.constant 0 : i32
    %c0_i32_2 = arith.constant 0 : i32
    return %c0_i32, %c0_i32_0, %c0_i32_1 : i32, i32, i32
  }
  func.func @transform_4(%arg0: i32) -> (i32, i32, i32) {
    %c0_i32 = arith.constant 0 : i32
    %c0_i32_0 = arith.constant 0 : i32
    %c0_i32_1 = arith.constant 0 : i32
    %c0_i32_2 = arith.constant 0 : i32
    return %c0_i32, %c0_i32_0, %c0_i32_1 : i32, i32, i32
  }
  func.func @transform_5(%arg0: i32) -> (i32, i32) {
    %c0_i32 = arith.constant 0 : i32
    %c0_i32_0 = arith.constant 0 : i32
    %c0_i32_1 = arith.constant 0 : i32
    return %c0_i32, %c0_i32_0 : i32, i32
  }
  func.func @transform_6(%arg0: i32) -> (i32, i32) {
    %c0_i32 = arith.constant 0 : i32
    %c0_i32_0 = arith.constant 0 : i32
    %c0_i32_1 = arith.constant 0 : i32
    return %c0_i32, %c0_i32_0 : i32, i32
  }
  func.func @transform_7(%arg0: i32) -> (i32, i32) {
    %c0_i32 = arith.constant 0 : i32
    %c0_i32_0 = arith.constant 0 : i32
    %c0_i32_1 = arith.constant 0 : i32
    return %c0_i32, %c0_i32_0 : i32, i32
  }
  func.func @transform_8(%arg0: i32) -> (i32, i32, i32) {
    %c0_i32 = arith.constant 0 : i32
    %c0_i32_0 = arith.constant 0 : i32
    %c0_i32_1 = arith.constant 0 : i32
    return %arg0, %c0_i32, %c0_i32_0 : i32, i32, i32
  }
}

</mosaic_0001>

<llo_original>
// kernel: bottleneck_forward.1
$region0: #{bottleneck_forward.1}
  #allocation0 [shape = 'u32[]', space=smem, size = 0x4, offset = 0x4, fixed_abs, tag = 'smem constant byte address 0x4 - core index']
  #allocation1 [shape = 'u32[72,128]{1,0:T(1,128)}', space=vmem, size = 0x9000, scoped, tag = 'internal scratch']
  %s0 = inlined_call_operand.vmem [shape: f32[2,16,256], index: 0, kind: input, shape index: {}]
  %s1 = inlined_call_operand.vmem [shape: f32[4,16], index: 1, kind: input, shape index: {}]
  %s2 = inlined_call_operand.vmem [shape: f32[4,1], index: 2, kind: input, shape index: {}]
  %s3 = inlined_call_operand.vmem [shape: f32[9,4,4], index: 3, kind: input, shape index: {}]
  %s4 = inlined_call_operand.vmem [shape: f32[9,1,256], index: 4, kind: input, shape index: {}]
  %s5 = inlined_call_operand.vmem [shape: f32[4,1], index: 5, kind: input, shape index: {}]
  %s6 = inlined_call_operand.vmem [shape: f32[16,4], index: 6, kind: input, shape index: {}]
  %s7 = inlined_call_operand.vmem [shape: f32[16,1], index: 7, kind: input, shape index: {}]
  %s8 = inlined_call_operand.vmem [shape: f32[2,16,256], index: 8, kind: output, shape index: {}]
  %s9 = sld [smem:[#allocation0]]
  $region65: #{bottleneck_forward.1} parent=0
    _
  %s11 = ssub.s32 1, %s9
  %s12 = scalar_select 0, %s11, %s9
  loop: start=0, step=1, limit=4
  $region2: #{bottleneck_forward.1} parent=0 // loop_pre_header
    _
  $region3: #{bottleneck_forward.1} parent=0 // loop_header
    %s14 = sphi 0, %s18
    %p15 = scmp.ge.s32.totalorder %s14, 4
    %s24 = sphi 0, %s26
    %s27 = sphi 0, %s24
    %s28 = sphi 0, %s27
    %s44 = sphi 0, %s28
    %s48 = sphi 0, %s48
    %s50 = sphi 0, %s48
    %s51 = sphi 0, %s50
    %s65 = sphi 0, %s51
    %s69 = sphi 0, %s69
    %s71 = sphi 0, %s69
    %s72 = sphi 0, %s71
    %s86 = sphi 0, %s72
    %s90 = sphi 0, %s90
    %s92 = sphi 0, %s90
    %s93 = sphi 0, %s92
    %s107 = sphi 0, %s93
    %s111 = sphi 0, %s111
    %s113 = sphi 0, %s111
    %s114 = sphi 0, %s113
    %s128 = sphi 0, %s114
    %s132 = sphi 0, %s132
    %s134 = sphi 0, %s132
    %s135 = sphi 0, %s134
    %s149 = sphi 0, %s135
    %s153 = sphi 0, %s153
    %s155 = sphi 0, %s153
    %s156 = sphi 0, %s155
    %s170 = sphi 0, %s156
    %s174 = sphi 0, %s174
    %s176 = sphi 0, %s174
    %s177 = sphi 0, %s176
    %s191 = sphi 0, %s177
    %s197 = sphi 0, %s199
    %s200 = sphi 0, %s197
    %s201 = sphi 0, %s200
    %s217 = sphi 0, %s201
  $region4: #{bottleneck_forward.1} parent=0 // loop_header_branch
    %17 = sbr.rel (%p15) target = $region8
  $region5: #{bottleneck_forward.1} parent=0 // loop_body
    %s19 = ssub.s32 %s14, 1
    %s20 = ssub.s32 %s14, 2
    %s21 = sadd.s32 %s14, 1
    %s22 = ssub.s32 %s14, %s21
    %p23 = scmp.eq.s32.totalorder %s22, 0
    %s25 = sadd.s32 %s24, 1
    %s26 = scalar_select %p23, %s24, %s25
    %p29 = pneg %p23
    %p30 = scmp.eq.s32.totalorder %s14, 1
    %p31 = por %p29, %p30
    %p32 = scmp.ne.s32.totalorder %s24, %s27
    %p33 = scmp.eq.s32.totalorder %s14, 0
    %p34 = por %p32, %p33
    %p35 = scmp.ne.s32.totalorder %s24, %s27
    %p36 = scmp.eq.s32.totalorder %s19, 1
    %p37 = por %p35, %p36
    %p38 = scmp.ne.s32.totalorder %s27, %s28
    %p39 = scmp.eq.s32.totalorder %s19, 0
    %p40 = por %p38, %p39
    %p41 = scmp.ne.s32.totalorder %s27, %s28
    %p42 = scmp.eq.s32.totalorder %s20, 1
    %p43 = por %p41, %p42
    %p45 = scmp.ne.s32.totalorder %s28, %s44
    %p46 = scmp.eq.s32.totalorder %s20, 0
    %p47 = por %p45, %p46
    %s49 = sadd.s32 %s48, 1
    %p52 = scmp.eq.s32.totalorder %s14, 1
    %p53 = scmp.ne.s32.totalorder %s48, %s50
    %p54 = scmp.eq.s32.totalorder %s14, 0
    %p55 = por %p53, %p54
    %p56 = scmp.ne.s32.totalorder %s48, %s50
    %p57 = scmp.eq.s32.totalorder %s19, 1
    %p58 = por %p56, %p57
    %p59 = scmp.ne.s32.totalorder %s50, %s51
    %p60 = scmp.eq.s32.totalorder %s19, 0
    %p61 = por %p59, %p60
    %p62 = scmp.ne.s32.totalorder %s50, %s51
    %p63 = scmp.eq.s32.totalorder %s20, 1
    %p64 = por %p62, %p63
    %p66 = scmp.ne.s32.totalorder %s51, %s65
    %p67 = scmp.eq.s32.totalorder %s20, 0
    %p68 = por %p66, %p67
    %s70 = sadd.s32 %s69, 1
    %p73 = scmp.eq.s32.totalorder %s14, 1
    %p74 = scmp.ne.s32.totalorder %s69, %s71
    %p75 = scmp.eq.s32.totalorder %s14, 0
    %p76 = por %p74, %p75
    %p77 = scmp.ne.s32.totalorder %s69, %s71
    %p78 = scmp.eq.s32.totalorder %s19, 1
    %p79 = por %p77, %p78
    %p80 = scmp.ne.s32.totalorder %s71, %s72
    %p81 = scmp.eq.s32.totalorder %s19, 0
    %p82 = por %p80, %p81
    %p83 = scmp.ne.s32.totalorder %s71, %s72
    %p84 = scmp.eq.s32.totalorder %s20, 1
    %p85 = por %p83, %p84
    %p87 = scmp.ne.s32.totalorder %s72, %s86
    %p88 = scmp.eq.s32.totalorder %s20, 0
    %p89 = por %p87, %p88
    %s91 = sadd.s32 %s90, 1
    %p94 = scmp.eq.s32.totalorder %s14, 1
    %p95 = scmp.ne.s32.totalorder %s90, %s92
    %p96 = scmp.eq.s32.totalorder %s14, 0
    %p97 = por %p95, %p96
    %p98 = scmp.ne.s32.totalorder %s90, %s92
    %p99 = scmp.eq.s32.totalorder %s19, 1
    %p100 = por %p98, %p99
    %p101 = scmp.ne.s32.totalorder %s92, %s93
    %p102 = scmp.eq.s32.totalorder %s19, 0
    %p103 = por %p101, %p102
    %p104 = scmp.ne.s32.totalorder %s92, %s93
    %p105 = scmp.eq.s32.totalorder %s20, 1
    %p106 = por %p104, %p105
    %p108 = scmp.ne.s32.totalorder %s93, %s107
    %p109 = scmp.eq.s32.totalorder %s20, 0
    %p110 = por %p108, %p109
    %s112 = sadd.s32 %s111, 1
    %p115 = scmp.eq.s32.totalorder %s14, 1
    %p116 = scmp.ne.s32.totalorder %s111, %s113
    %p117 = scmp.eq.s32.totalorder %s14, 0
    %p118 = por %p116, %p117
    %p119 = scmp.ne.s32.totalorder %s111, %s113
    %p120 = scmp.eq.s32.totalorder %s19, 1
    %p121 = por %p119, %p120
    %p122 = scmp.ne.s32.totalorder %s113, %s114
    %p123 = scmp.eq.s32.totalorder %s19, 0
    %p124 = por %p122, %p123
    %p125 = scmp.ne.s32.totalorder %s113, %s114
    %p126 = scmp.eq.s32.totalorder %s20, 1
    %p127 = por %p125, %p126
    %p129 = scmp.ne.s32.totalorder %s114, %s128
    %p130 = scmp.eq.s32.totalorder %s20, 0
    %p131 = por %p129, %p130
    %s133 = sadd.s32 %s132, 1
    %p136 = scmp.eq.s32.totalorder %s14, 1
    %p137 = scmp.ne.s32.totalorder %s132, %s134
    %p138 = scmp.eq.s32.totalorder %s14, 0
    %p139 = por %p137, %p138
    %p140 = scmp.ne.s32.totalorder %s132, %s134
    %p141 = scmp.eq.s32.totalorder %s19, 1
    %p142 = por %p140, %p141
    %p143 = scmp.ne.s32.totalorder %s134, %s135
    %p144 = scmp.eq.s32.totalorder %s19, 0
    %p145 = por %p143, %p144
    %p146 = scmp.ne.s32.totalorder %s134, %s135
    %p147 = scmp.eq.s32.totalorder %s20, 1
    %p148 = por %p146, %p147
    %p150 = scmp.ne.s32.totalorder %s135, %s149
    %p151 = scmp.eq.s32.totalorder %s20, 0
    %p152 = por %p150, %p151
    %s154 = sadd.s32 %s153, 1
    %p157 = scmp.eq.s32.totalorder %s14, 1
    %p158 = scmp.ne.s32.totalorder %s153, %s155
    %p159 = scmp.eq.s32.totalorder %s14, 0
    %p160 = por %p158, %p159
    %p161 = scmp.ne.s32.totalorder %s153, %s155
    %p162 = scmp.eq.s32.totalorder %s19, 1
    %p163 = por %p161, %p162
    %p164 = scmp.ne.s32.totalorder %s155, %s156
    %p165 = scmp.eq.s32.totalorder %s19, 0
    %p166 = por %p164, %p165
    %p167 = scmp.ne.s32.totalorder %s155, %s156
    %p168 = scmp.eq.s32.totalorder %s20, 1
    %p169 = por %p167, %p168
    %p171 = scmp.ne.s32.totalorder %s156, %s170
    %p172 = scmp.eq.s32.totalorder %s20, 0
    %p173 = por %p171, %p172
    %s175 = sadd.s32 %s174, 1
    %p178 = scmp.eq.s32.totalorder %s14, 1
    %p179 = scmp.ne.s32.totalorder %s174, %s176
    %p180 = scmp.eq.s32.totalorder %s14, 0
    %p181 = por %p179, %p180
    %p182 = scmp.ne.s32.totalorder %s174, %s176
    %p183 = scmp.eq.s32.totalorder %s19, 1
    %p184 = por %p182, %p183
    %p185 = scmp.ne.s32.totalorder %s176, %s177
    %p186 = scmp.eq.s32.totalorder %s19, 0
    %p187 = por %p185, %p186
    %p188 = scmp.ne.s32.totalorder %s176, %s177
    %p189 = scmp.eq.s32.totalorder %s20, 1
    %p190 = por %p188, %p189
    %p192 = scmp.ne.s32.totalorder %s177, %s191
    %p193 = scmp.eq.s32.totalorder %s20, 0
    %p194 = por %p192, %p193
    %s195 = ssub.s32 %s14, %s21
    %p196 = scmp.eq.s32.totalorder %s195, 0
    %s198 = sadd.s32 %s197, 1
    %s199 = scalar_select %p196, %s197, %s198
    %p202 = pneg %p196
    %p203 = scmp.eq.s32.totalorder %s14, 1
    %p204 = por %p202, %p203
    %p205 = scmp.ne.s32.totalorder %s197, %s200
    %p206 = scmp.eq.s32.totalorder %s14, 0
    %p207 = por %p205, %p206
    %p208 = scmp.ne.s32.totalorder %s197, %s200
    %p209 = scmp.eq.s32.totalorder %s19, 1
    %p210 = por %p208, %p209
    %p211 = scmp.ne.s32.totalorder %s200, %s201
    %p212 = scmp.eq.s32.totalorder %s19, 0
    %p213 = por %p211, %p212
    %p214 = scmp.ne.s32.totalorder %s200, %s201
    %p215 = scmp.eq.s32.totalorder %s20, 1
    %p216 = por %p214, %p215
    %p218 = scmp.ne.s32.totalorder %s201, %s217
    %p219 = scmp.eq.s32.totalorder %s20, 0
    %p220 = por %p218, %p219
    %p221 = scmp.le.s32.totalorder 1, %s14
    %p222 = scmp.lt.s32.totalorder %s14, 3
    %p223 = pnand %p221, %p222
    %p224 = pneg %p223
    // Predicated region
    $region9: #{bottleneck_forward.1} parent=5 // pred_check
      _
    $region10: #{bottleneck_forward.1} parent=5 // pred_check_branch
      %226 = sbr.rel (%p223) target = $region12
    $region11: #{bottleneck_forward.1} parent=5 // pred_region
      %s227 = ssub.s32 %s14, 1
      // Predicated region
      $region13: #{bottleneck_forward.1} parent=11 // pred_check
        %p228 = pneg %p61
      $region14: #{bottleneck_forward.1} parent=11 // pred_check_branch
        %230 = sbr.rel (%p228) target = $region16
      $region15: #{bottleneck_forward.1} parent=11 // pred_region
        _
      $region16: #{bottleneck_forward.1} parent=11 // pred_fallthru
        _
      // Predicated region
      $region17: #{bottleneck_forward.1} parent=11 // pred_check
        %p231 = pneg %p82
      $region18: #{bottleneck_forward.1} parent=11 // pred_check_branch
        %233 = sbr.rel (%p231) target = $region20
      $region19: #{bottleneck_forward.1} parent=11 // pred_region
        _
      $region20: #{bottleneck_forward.1} parent=11 // pred_fallthru
        _
      // Predicated region
      $region21: #{bottleneck_forward.1} parent=11 // pred_check
        %p234 = pneg %p103
      $region22: #{bottleneck_forward.1} parent=11 // pred_check_branch
        %236 = sbr.rel (%p234) target = $region24
      $region23: #{bottleneck_forward.1} parent=11 // pred_region
        _
      $region24: #{bottleneck_forward.1} parent=11 // pred_fallthru
        _
      // Predicated region
      $region25: #{bottleneck_forward.1} parent=11 // pred_check
        %p237 = pneg %p124
      $region26: #{bottleneck_forward.1} parent=11 // pred_check_branch
        %239 = sbr.rel (%p237) target = $region28
      $region27: #{bottleneck_forward.1} parent=11 // pred_region
        _
      $region28: #{bottleneck_forward.1} parent=11 // pred_fallthru
        _
      // Predicated region
      $region29: #{bottleneck_forward.1} parent=11 // pred_check
        %p240 = pneg %p145
      $region30: #{bottleneck_forward.1} parent=11 // pred_check_branch
        %242 = sbr.rel (%p240) target = $region32
      $region31: #{bottleneck_forward.1} parent=11 // pred_region
        _
      $region32: #{bottleneck_forward.1} parent=11 // pred_fallthru
        _
      // Predicated region
      $region33: #{bottleneck_forward.1} parent=11 // pred_check
        %p243 = pneg %p166
      $region34: #{bottleneck_forward.1} parent=11 // pred_check_branch
        %245 = sbr.rel (%p243) target = $region36
      $region35: #{bottleneck_forward.1} parent=11 // pred_region
        _
      $region36: #{bottleneck_forward.1} parent=11 // pred_fallthru
        _
      // Predicated region
      $region37: #{bottleneck_forward.1} parent=11 // pred_check
        %p246 = pneg %p187
      $region38: #{bottleneck_forward.1} parent=11 // pred_check_branch
        %248 = sbr.rel (%p246) target = $region40
      $region39: #{bottleneck_forward.1} parent=11 // pred_region
        _
      $region40: #{bottleneck_forward.1} parent=11 // pred_fallthru
        _
    $region12: #{bottleneck_forward.1} parent=5 // pred_fallthru
      _
    %p249 = scmp.lt.s32.totalorder %s14, 2
    // Predicated region
    $region41: #{bottleneck_forward.1} parent=5 // pred_check
      %p250 = pneg %p249
    $region42: #{bottleneck_forward.1} parent=5 // pred_check_branch
      %252 = sbr.rel (%p250) target = $region44
    $region43: #{bottleneck_forward.1} parent=5 // pred_region
      // Predicated region
      $region45: #{bottleneck_forward.1} parent=43 // pred_check
        %p253 = pneg %p34
      $region46: #{bottleneck_forward.1} parent=43 // pred_check_branch
        %255 = sbr.rel (%p253) target = $region48
      $region47: #{bottleneck_forward.1} parent=43 // pred_region
        %p256 = scmp.lt.s32.totalorder %s14, 1
        %s257 = scalar_select %p256, %s14, 1
        %s258 = smul.addr %s257, 4
        %s259 = smul.addr %s258, 8
        %s260 = scalar_lea.vmem %s0, %s259
      $region48: #{bottleneck_forward.1} parent=43 // pred_fallthru
        _
    $region44: #{bottleneck_forward.1} parent=5 // pred_fallthru
      _
    %p261 = scmp.le.s32.totalorder 1, %s14
    %p262 = scmp.lt.s32.totalorder %s14, 3
    %p263 = pnand %p261, %p262
    %p264 = pneg %p263
    // Predicated region
    $region49: #{bottleneck_forward.1} parent=5 // pred_check
      _
    $region50: #{bottleneck_forward.1} parent=5 // pred_check_branch
      %266 = sbr.rel (%p263) target = $region52
    $region51: #{bottleneck_forward.1} parent=5 // pred_region
      %s267 = ssub.s32 %s14, 1
      %p268 = scmp.lt.s32.totalorder %s19, 1
      %s269 = scalar_select %p268, %s19, 1
      %s270 = smul.addr %s269, 4
      %s271 = smul.addr %s270, 8
      %s272 = scalar_lea.vmem %s0, %s271
      %p273 = pneg %p40
      %p274 = pneg %p37
      %p275 = pneg %p61
      %p276 = pneg %p58
      %p277 = pneg %p82
      %p278 = pneg %p79
      %p279 = pneg %p103
      %p280 = pneg %p100
      %p281 = pneg %p124
      %p282 = pneg %p121
      %p283 = pneg %p145
      %p284 = pneg %p142
      %p285 = pneg %p166
      %p286 = pneg %p163
      %p287 = pneg %p187
      %p288 = pneg %p184
      %p289 = pneg %p213
      %p290 = pneg %p210
      %p291 = scmp.lt.s32.totalorder %s19, 1
      %s292 = scalar_select %p291, %s19, 1
      %s293 = smul.addr %s292, 4
      %s294 = smul.addr %s293, 8
      %s295 = scalar_lea.vmem %s8, %s294
      %p296 = scmp.lt.s32.totalorder %s19, 1
      %s297 = scalar_select %p296, %s19, 1
      %s298 = smul.addr %s297, 4
      %s299 = smul.addr %s298, 8
      %s300 = scalar_lea.vmem %s0, %s299
      %p301 = scmp.lt.s32.totalorder %s19, 1
      %s302 = scalar_select %p301, %s19, 1
      %s303 = smul.addr %s302, 4
      %s304 = smul.addr %s303, 8
      %s305 = scalar_lea.vmem %s8, %s304
      %v306 = vld [vmem:[%s300] sm:$0xff]
      %v307 = vld [vmem:[%s300 + $0x8] sm:$0xff]
      %v308 = vld [vmem:[%s300 + $0x10] sm:$0xff]
      %v309 = vld [vmem:[%s300 + $0x18] sm:$0xff]
      %v310 = vld [vmem:[%s1] sm:$0xf]
      %v311 = vld [vmem:[%s2] sm:$0xf]
      %313 = vset.pattern.permute.xlu0 0
      %314 = vperm.xlu0 %313, %v311
      %v315 = vpop.permute.xlu0 %314
      %vm317 = vcmask 130048
      %v319 = vsel %vm317, %v310, 0
      %321 = vmatpush.msra.mxu0 0.0
      %322 = vmatpush.msra.mxu0 0.0
      %323 = vmatpush.msra.mxu0 0.0
      %324 = vmatpush.msra.mxu0 0.0
      %325 = vmatpush.msra.mxu0 0.0
      %326 = vmatpush.msra.mxu0 0.0
      %327 = vmatpush.msra.mxu0 0.0
      %328 = vmatpush.msra.mxu0 0.0
      %329 = vmatpush.msra.mxu0 0.0
      %330 = vmatpush.msra.mxu0 0.0
      %331 = vmatpush.msra.mxu0 0.0
      %332 = vmatpush.msra.mxu0 0.0
      %333 = vmatpush.msra.mxu0 0.0
      %334 = vmatpush.msra.mxu0 0.0
      %335 = vmatpush.msra.mxu0 %v308
      %336 = vmatpush.msra.mxu0 %v306
      %337 = vmatmul.f32.gmra.mxu0 %v319
      %v338 = vpop.f32.mrf.mxu0
      %v339 = vadd.f32 %v315, %v338
      %340 = vdwg.mxu0
      %341 = vmatpush.msra.mxu0 0.0
      %342 = vmatpush.msra.mxu0 0.0
      %343 = vmatpush.msra.mxu0 0.0
      %344 = vmatpush.msra.mxu0 0.0
      %345 = vmatpush.msra.mxu0 0.0
      %346 = vmatpush.msra.mxu0 0.0
      %347 = vmatpush.msra.mxu0 0.0
      %348 = vmatpush.msra.mxu0 0.0
      %349 = vmatpush.msra.mxu0 0.0
      %350 = vmatpush.msra.mxu0 0.0
      %351 = vmatpush.msra.mxu0 0.0
      %352 = vmatpush.msra.mxu0 0.0
      %353 = vmatpush.msra.mxu0 0.0
      %354 = vmatpush.msra.mxu0 0.0
      %355 = vmatpush.msra.mxu0 %v309
      %356 = vmatpush.msra.mxu0 %v307
      %357 = vmatmul.f32.gmra.mxu0 %v319
      %v358 = vpop.f32.mrf.mxu0
      %v359 = vadd.f32 %v315, %v358
      %360 = vdwg.mxu0
      %v361 = vmax.f32 %v339, 0.0
      %v362 = vmax.f32 %v359, 0.0
      %s363 = scalar_lea.vmem %s3, 16
      %v364 = vld [vmem:[%s363] sm:$0xf]
      %366 = vrot.lane.b32.xlu0 %v362, 17
      %v367 = vpop.permute.xlu0 %366
      %370 = vrot.lane.b32.xlu0 %v361, 17
      %v371 = vpop.permute.xlu0 %370
      %vm372 = vcmask 138240
      %v373 = vsel %vm372, %v371, %v367
      %v376 = vsel %vm372, %v367, %v371
      %v377 = vld [vmem:[%s4] sm:$0x3]
      %v379 = vperm.slane %v377, 0
      %v380 = vperm.slane %v377, 1
      %v383 = vmul.f32 %v376, %v379
      %v384 = vmul.f32 %v373, %v380
      %v385 = vld [vmem:[%s3] sm:$0xf]
      %vm386 = vcmask 31744
      %v388 = vsel %vm386, %v385, 0
      %vm390 = vcmask 1043456
      %v392 = vsel %vm390, %v383, 0
      %v395 = vsel %vm390, %v384, 0
      %397 = vmatpush.msra.mxu0 0.0
      %398 = vmatpush.msra.mxu0 0.0
      %399 = vmatpush.msra.mxu0 0.0
      %400 = vmatpush.msra.mxu0 0.0
      %401 = vmatpush.msra.mxu0 0.0
      %402 = vmatpush.msra.mxu0 0.0
      %403 = vmatpush.msra.mxu0 0.0
      %404 = vmatpush.msra.mxu0 0.0
      %405 = vmatpush.msra.mxu0 0.0
      %406 = vmatpush.msra.mxu0 0.0
      %407 = vmatpush.msra.mxu0 0.0
      %408 = vmatpush.msra.mxu0 0.0
      %409 = vmatpush.msra.mxu0 0.0
      %410 = vmatpush.msra.mxu0 0.0
      %411 = vmatpush.msra.mxu0 0.0
      %412 = vmatpush.msra.mxu0 %v392
      %413 = vmatmul.f32.gmra.mxu0 %v388
      %v414 = vpop.f32.mrf.mxu0
      %v415 = vadd.f32 0.0, %v414
      %416 = vdwg.mxu0
      %417 = vmatpush.msra.mxu0 0.0
      %418 = vmatpush.msra.mxu0 0.0
      %419 = vmatpush.msra.mxu0 0.0
      %420 = vmatpush.msra.mxu0 0.0
      %421 = vmatpush.msra.mxu0 0.0
      %422 = vmatpush.msra.mxu0 0.0
      %423 = vmatpush.msra.mxu0 0.0
      %424 = vmatpush.msra.mxu0 0.0
      %425 = vmatpush.msra.mxu0 0.0
      %426 = vmatpush.msra.mxu0 0.0
      %427 = vmatpush.msra.mxu0 0.0
      %428 = vmatpush.msra.mxu0 0.0
      %429 = vmatpush.msra.mxu0 0.0
      %430 = vmatpush.msra.mxu0 0.0
      %431 = vmatpush.msra.mxu0 0.0
      %432 = vmatpush.msra.mxu0 %v395
      %433 = vmatmul.f32.gmra.mxu0 %v388
      %v434 = vpop.f32.mrf.mxu0
      %v435 = vadd.f32 0.0, %v434
      %436 = vdwg.mxu0
      %v438 = vsel %vm386, %v364, 0
      %v440 = vsel %vm390, %v361, 0
      %v442 = vsel %vm390, %v362, 0
      %444 = vmatpush.msra.mxu0 0.0
      %445 = vmatpush.msra.mxu0 0.0
      %446 = vmatpush.msra.mxu0 0.0
      %447 = vmatpush.msra.mxu0 0.0
      %448 = vmatpush.msra.mxu0 0.0
      %449 = vmatpush.msra.mxu0 0.0
      %450 = vmatpush.msra.mxu0 0.0
      %451 = vmatpush.msra.mxu0 0.0
      %452 = vmatpush.msra.mxu0 0.0
      %453 = vmatpush.msra.mxu0 0.0
      %454 = vmatpush.msra.mxu0 0.0
      %455 = vmatpush.msra.mxu0 0.0
      %456 = vmatpush.msra.mxu0 0.0
      %457 = vmatpush.msra.mxu0 0.0
      %458 = vmatpush.msra.mxu0 0.0
      %459 = vmatpush.msra.mxu0 %v440
      %460 = vmatmul.f32.gmra.mxu0 %v438
      %v461 = vpop.f32.mrf.mxu0
      %v462 = vadd.f32 %v415, %v461
      %463 = vdwg.mxu0
      %464 = vmatpush.msra.mxu0 0.0
      %465 = vmatpush.msra.mxu0 0.0
      %466 = vmatpush.msra.mxu0 0.0
      %467 = vmatpush.msra.mxu0 0.0
      %468 = vmatpush.msra.mxu0 0.0
      %469 = vmatpush.msra.mxu0 0.0
      %470 = vmatpush.msra.mxu0 0.0
      %471 = vmatpush.msra.mxu0 0.0
      %472 = vmatpush.msra.mxu0 0.0
      %473 = vmatpush.msra.mxu0 0.0
      %474 = vmatpush.msra.mxu0 0.0
      %475 = vmatpush.msra.mxu0 0.0
      %476 = vmatpush.msra.mxu0 0.0
      %477 = vmatpush.msra.mxu0 0.0
      %478 = vmatpush.msra.mxu0 0.0
      %479 = vmatpush.msra.mxu0 %v442
      %480 = vmatmul.f32.gmra.mxu0 %v438
      %v481 = vpop.f32.mrf.mxu0
      %v482 = vadd.f32 %v435, %v481
      %483 = vdwg.mxu0
      %484 = vrot.lane.b32.xlu0 %v362, 16
      %v485 = vpop.permute.xlu0 %484
      %487 = vrot.lane.b32.xlu0 %v361, 16
      %v488 = vpop.permute.xlu0 %487
      %v489 = vsel %vm317, %v488, %v485
      %v492 = vsel %vm317, %v485, %v488
      %s493 = scalar_lea.vmem %s4, 2
      %v494 = vld [vmem:[%s493] sm:$0x3]
      %v496 = vperm.slane %v494, 0
      %v497 = vperm.slane %v494, 1
      %v500 = vmul.f32 %v492, %v496
      %v501 = vmul.f32 %v489, %v497
      %s502 = scalar_lea.vmem %s3, 4
      %v503 = vld [vmem:[%s502] sm:$0xf]
      %v505 = vsel %vm386, %v503, 0
      %v508 = vsel %vm390, %v500, 0
      %v511 = vsel %vm390, %v501, 0
      %513 = vmatpush.msra.mxu0 0.0
      %514 = vmatpush.msra.mxu0 0.0
      %515 = vmatpush.msra.mxu0 0.0
      %516 = vmatpush.msra.mxu0 0.0
      %517 = vmatpush.msra.mxu0 0.0
      %518 = vmatpush.msra.mxu0 0.0
      %519 = vmatpush.msra.mxu0 0.0
      %520 = vmatpush.msra.mxu0 0.0
      %521 = vmatpush.msra.mxu0 0.0
      %522 = vmatpush.msra.mxu0 0.0
      %523 = vmatpush.msra.mxu0 0.0
      %524 = vmatpush.msra.mxu0 0.0
      %525 = vmatpush.msra.mxu0 0.0
      %526 = vmatpush.msra.mxu0 0.0
      %527 = vmatpush.msra.mxu0 0.0
      %528 = vmatpush.msra.mxu0 %v508
      %529 = vmatmul.f32.gmra.mxu0 %v505
      %v530 = vpop.f32.mrf.mxu0
      %v531 = vadd.f32 0.0, %v530
      %532 = vdwg.mxu0
      %533 = vmatpush.msra.mxu0 0.0
      %534 = vmatpush.msra.mxu0 0.0
      %535 = vmatpush.msra.mxu0 0.0
      %536 = vmatpush.msra.mxu0 0.0
      %537 = vmatpush.msra.mxu0 0.0
      %538 = vmatpush.msra.mxu0 0.0
      %539 = vmatpush.msra.mxu0 0.0
      %540 = vmatpush.msra.mxu0 0.0
      %541 = vmatpush.msra.mxu0 0.0
      %542 = vmatpush.msra.mxu0 0.0
      %543 = vmatpush.msra.mxu0 0.0
      %544 = vmatpush.msra.mxu0 0.0
      %545 = vmatpush.msra.mxu0 0.0
      %546 = vmatpush.msra.mxu0 0.0
      %547 = vmatpush.msra.mxu0 0.0
      %548 = vmatpush.msra.mxu0 %v511
      %549 = vmatmul.f32.gmra.mxu0 %v505
      %v550 = vpop.f32.mrf.mxu0
      %v551 = vadd.f32 0.0, %v550
      %552 = vdwg.mxu0
      %v553 = vadd.f32 %v462, %v531
      %v554 = vadd.f32 %v482, %v551
      %555 = vrot.lane.b32.xlu0 %v362, 15
      %v556 = vpop.permute.xlu0 %555
      %558 = vrot.lane.b32.xlu0 %v361, 15
      %v559 = vpop.permute.xlu0 %558
      %vm560 = vcmask 121856
      %v561 = vsel %vm560, %v559, %v556
      %v564 = vsel %vm560, %v556, %v559
      %s565 = scalar_lea.vmem %s4, 4
      %v566 = vld [vmem:[%s565] sm:$0x3]
      %v568 = vperm.slane %v566, 0
      %v569 = vperm.slane %v566, 1
      %v572 = vmul.f32 %v564, %v568
      %v573 = vmul.f32 %v561, %v569
      %s574 = scalar_lea.vmem %s3, 8
      %v575 = vld [vmem:[%s574] sm:$0xf]
      %v577 = vsel %vm386, %v575, 0
      %v580 = vsel %vm390, %v572, 0
      %v583 = vsel %vm390, %v573, 0
      %585 = vmatpush.msra.mxu0 0.0
      %586 = vmatpush.msra.mxu0 0.0
      %587 = vmatpush.msra.mxu0 0.0
      %588 = vmatpush.msra.mxu0 0.0
      %589 = vmatpush.msra.mxu0 0.0
      %590 = vmatpush.msra.mxu0 0.0
      %591 = vmatpush.msra.mxu0 0.0
      %592 = vmatpush.msra.mxu0 0.0
      %593 = vmatpush.msra.mxu0 0.0
      %594 = vmatpush.msra.mxu0 0.0
      %595 = vmatpush.msra.mxu0 0.0
      %596 = vmatpush.msra.mxu0 0.0
      %597 = vmatpush.msra.mxu0 0.0
      %598 = vmatpush.msra.mxu0 0.0
      %599 = vmatpush.msra.mxu0 0.0
      %600 = vmatpush.msra.mxu0 %v580
      %601 = vmatmul.f32.gmra.mxu0 %v577
      %v602 = vpop.f32.mrf.mxu0
      %v603 = vadd.f32 0.0, %v602
      %604 = vdwg.mxu0
      %605 = vmatpush.msra.mxu0 0.0
      %606 = vmatpush.msra.mxu0 0.0
      %607 = vmatpush.msra.mxu0 0.0
      %608 = vmatpush.msra.mxu0 0.0
      %609 = vmatpush.msra.mxu0 0.0
      %610 = vmatpush.msra.mxu0 0.0
      %611 = vmatpush.msra.mxu0 0.0
      %612 = vmatpush.msra.mxu0 0.0
      %613 = vmatpush.msra.mxu0 0.0
      %614 = vmatpush.msra.mxu0 0.0
      %615 = vmatpush.msra.mxu0 0.0
      %616 = vmatpush.msra.mxu0 0.0
      %617 = vmatpush.msra.mxu0 0.0
      %618 = vmatpush.msra.mxu0 0.0
      %619 = vmatpush.msra.mxu0 0.0
      %620 = vmatpush.msra.mxu0 %v583
      %621 = vmatmul.f32.gmra.mxu0 %v577
      %v622 = vpop.f32.mrf.mxu0
      %v623 = vadd.f32 0.0, %v622
      %624 = vdwg.mxu0
      %v625 = vadd.f32 %v553, %v603
      %v626 = vadd.f32 %v554, %v623
      %627 = vrot.lane.b32.xlu0 %v362, 1
      %v628 = vpop.permute.xlu0 %627
      %630 = vrot.lane.b32.xlu0 %v361, 1
      %v631 = vpop.permute.xlu0 %630
      %vm632 = vcmask 7168
      %v633 = vsel %vm632, %v631, %v628
      %v636 = vsel %vm632, %v628, %v631
      %s637 = scalar_lea.vmem %s4, 6
      %v638 = vld [vmem:[%s637] sm:$0x3]
      %v640 = vperm.slane %v638, 0
      %v641 = vperm.slane %v638, 1
      %v644 = vmul.f32 %v636, %v640
      %v645 = vmul.f32 %v633, %v641
      %s646 = scalar_lea.vmem %s3, 12
      %v647 = vld [vmem:[%s646] sm:$0xf]
      %v649 = vsel %vm386, %v647, 0
      %v652 = vsel %vm390, %v644, 0
      %v655 = vsel %vm390, %v645, 0
      %657 = vmatpush.msra.mxu0 0.0
      %658 = vmatpush.msra.mxu0 0.0
      %659 = vmatpush.msra.mxu0 0.0
      %660 = vmatpush.msra.mxu0 0.0
      %661 = vmatpush.msra.mxu0 0.0
      %662 = vmatpush.msra.mxu0 0.0
      %663 = vmatpush.msra.mxu0 0.0
      %664 = vmatpush.msra.mxu0 0.0
      %665 = vmatpush.msra.mxu0 0.0
      %666 = vmatpush.msra.mxu0 0.0
      %667 = vmatpush.msra.mxu0 0.0
      %668 = vmatpush.msra.mxu0 0.0
      %669 = vmatpush.msra.mxu0 0.0
      %670 = vmatpush.msra.mxu0 0.0
      %671 = vmatpush.msra.mxu0 0.0
      %672 = vmatpush.msra.mxu0 %v652
      %673 = vmatmul.f32.gmra.mxu0 %v649
      %v674 = vpop.f32.mrf.mxu0
      %v675 = vadd.f32 0.0, %v674
      %676 = vdwg.mxu0
      %677 = vmatpush.msra.mxu0 0.0
      %678 = vmatpush.msra.mxu0 0.0
      %679 = vmatpush.msra.mxu0 0.0
      %680 = vmatpush.msra.mxu0 0.0
      %681 = vmatpush.msra.mxu0 0.0
      %682 = vmatpush.msra.mxu0 0.0
      %683 = vmatpush.msra.mxu0 0.0
      %684 = vmatpush.msra.mxu0 0.0
      %685 = vmatpush.msra.mxu0 0.0
      %686 = vmatpush.msra.mxu0 0.0
      %687 = vmatpush.msra.mxu0 0.0
      %688 = vmatpush.msra.mxu0 0.0
      %689 = vmatpush.msra.mxu0 0.0
      %690 = vmatpush.msra.mxu0 0.0
      %691 = vmatpush.msra.mxu0 0.0
      %692 = vmatpush.msra.mxu0 %v655
      %693 = vmatmul.f32.gmra.mxu0 %v649
      %v694 = vpop.f32.mrf.mxu0
      %v695 = vadd.f32 0.0, %v694
      %696 = vdwg.mxu0
      %v697 = vadd.f32 %v625, %v675
      %v698 = vadd.f32 %v626, %v695
      %699 = vrot.lane.b32.xlu0 %v361, 127
      %v700 = vpop.permute.xlu0 %699
      %701 = vrot.lane.b32.xlu0 %v362, 127
      %v702 = vpop.permute.xlu0 %701
      %vm703 = vcmask 1039360
      %v704 = vsel %vm703, %v700, %v702
      %v708 = vsel %vm703, %v702, %v700
      %s709 = scalar_lea.vmem %s4, 10
      %v710 = vld [vmem:[%s709] sm:$0x3]
      %v712 = vperm.slane %v710, 0
      %v713 = vperm.slane %v710, 1
      %v716 = vmul.f32 %v704, %v712
      %v717 = vmul.f32 %v708, %v713
      %s718 = scalar_lea.vmem %s3, 20
      %v719 = vld [vmem:[%s718] sm:$0xf]
      %v721 = vsel %vm386, %v719, 0
      %v724 = vsel %vm390, %v716, 0
      %v727 = vsel %vm390, %v717, 0
      %729 = vmatpush.msra.mxu0 0.0
      %730 = vmatpush.msra.mxu0 0.0
      %731 = vmatpush.msra.mxu0 0.0
      %732 = vmatpush.msra.mxu0 0.0
      %733 = vmatpush.msra.mxu0 0.0
      %734 = vmatpush.msra.mxu0 0.0
      %735 = vmatpush.msra.mxu0 0.0
      %736 = vmatpush.msra.mxu0 0.0
      %737 = vmatpush.msra.mxu0 0.0
      %738 = vmatpush.msra.mxu0 0.0
      %739 = vmatpush.msra.mxu0 0.0
      %740 = vmatpush.msra.mxu0 0.0
      %741 = vmatpush.msra.mxu0 0.0
      %742 = vmatpush.msra.mxu0 0.0
      %743 = vmatpush.msra.mxu0 0.0
      %744 = vmatpush.msra.mxu0 %v724
      %745 = vmatmul.f32.gmra.mxu0 %v721
      %v746 = vpop.f32.mrf.mxu0
      %v747 = vadd.f32 0.0, %v746
      %748 = vdwg.mxu0
      %749 = vmatpush.msra.mxu0 0.0
      %750 = vmatpush.msra.mxu0 0.0
      %751 = vmatpush.msra.mxu0 0.0
      %752 = vmatpush.msra.mxu0 0.0
      %753 = vmatpush.msra.mxu0 0.0
      %754 = vmatpush.msra.mxu0 0.0
      %755 = vmatpush.msra.mxu0 0.0
      %756 = vmatpush.msra.mxu0 0.0
      %757 = vmatpush.msra.mxu0 0.0
      %758 = vmatpush.msra.mxu0 0.0
      %759 = vmatpush.msra.mxu0 0.0
      %760 = vmatpush.msra.mxu0 0.0
      %761 = vmatpush.msra.mxu0 0.0
      %762 = vmatpush.msra.mxu0 0.0
      %763 = vmatpush.msra.mxu0 0.0
      %764 = vmatpush.msra.mxu0 %v727
      %765 = vmatmul.f32.gmra.mxu0 %v721
      %v766 = vpop.f32.mrf.mxu0
      %v767 = vadd.f32 0.0, %v766
      %768 = vdwg.mxu0
      %v769 = vadd.f32 %v697, %v747
      %v770 = vadd.f32 %v698, %v767
      %771 = vrot.lane.b32.xlu0 %v361, 113
      %v772 = vpop.permute.xlu0 %771
      %773 = vrot.lane.b32.xlu0 %v362, 113
      %v774 = vpop.permute.xlu0 %773
      %vm775 = vcmask 924672
      %v776 = vsel %vm775, %v772, %v774
      %v780 = vsel %vm775, %v774, %v772
      %s781 = scalar_lea.vmem %s4, 12
      %v782 = vld [vmem:[%s781] sm:$0x3]
      %v784 = vperm.slane %v782, 0
      %v785 = vperm.slane %v782, 1
      %v788 = vmul.f32 %v776, %v784
      %v789 = vmul.f32 %v780, %v785
      %s790 = scalar_lea.vmem %s3, 24
      %v791 = vld [vmem:[%s790] sm:$0xf]
      %v793 = vsel %vm386, %v791, 0
      %v796 = vsel %vm390, %v788, 0
      %v799 = vsel %vm390, %v789, 0
      %801 = vmatpush.msra.mxu0 0.0
      %802 = vmatpush.msra.mxu0 0.0
      %803 = vmatpush.msra.mxu0 0.0
      %804 = vmatpush.msra.mxu0 0.0
      %805 = vmatpush.msra.mxu0 0.0
      %806 = vmatpush.msra.mxu0 0.0
      %807 = vmatpush.msra.mxu0 0.0
      %808 = vmatpush.msra.mxu0 0.0
      %809 = vmatpush.msra.mxu0 0.0
      %810 = vmatpush.msra.mxu0 0.0
      %811 = vmatpush.msra.mxu0 0.0
      %812 = vmatpush.msra.mxu0 0.0
      %813 = vmatpush.msra.mxu0 0.0
      %814 = vmatpush.msra.mxu0 0.0
      %815 = vmatpush.msra.mxu0 0.0
      %816 = vmatpush.msra.mxu0 %v796
      %817 = vmatmul.f32.gmra.mxu0 %v793
      %v818 = vpop.f32.mrf.mxu0
      %v819 = vadd.f32 0.0, %v818
      %820 = vdwg.mxu0
      %821 = vmatpush.msra.mxu0 0.0
      %822 = vmatpush.msra.mxu0 0.0
      %823 = vmatpush.msra.mxu0 0.0
      %824 = vmatpush.msra.mxu0 0.0
      %825 = vmatpush.msra.mxu0 0.0
      %826 = vmatpush.msra.mxu0 0.0
      %827 = vmatpush.msra.mxu0 0.0
      %828 = vmatpush.msra.mxu0 0.0
      %829 = vmatpush.msra.mxu0 0.0
      %830 = vmatpush.msra.mxu0 0.0
      %831 = vmatpush.msra.mxu0 0.0
      %832 = vmatpush.msra.mxu0 0.0
      %833 = vmatpush.msra.mxu0 0.0
      %834 = vmatpush.msra.mxu0 0.0
      %835 = vmatpush.msra.mxu0 0.0
      %836 = vmatpush.msra.mxu0 %v799
      %837 = vmatmul.f32.gmra.mxu0 %v793
      %v838 = vpop.f32.mrf.mxu0
      %v839 = vadd.f32 0.0, %v838
      %840 = vdwg.mxu0
      %v841 = vadd.f32 %v769, %v819
      %v842 = vadd.f32 %v770, %v839
      %843 = vrot.lane.b32.xlu0 %v361, 112
      %v844 = vpop.permute.xlu0 %843
      %845 = vrot.lane.b32.xlu0 %v362, 112
      %v846 = vpop.permute.xlu0 %845
      %vm847 = vcmask 916480
      %v848 = vsel %vm847, %v844, %v846
      %v852 = vsel %vm847, %v846, %v844
      %s853 = scalar_lea.vmem %s4, 14
      %v854 = vld [vmem:[%s853] sm:$0x3]
      %v856 = vperm.slane %v854, 0
      %v857 = vperm.slane %v854, 1
      %v860 = vmul.f32 %v848, %v856
      %v861 = vmul.f32 %v852, %v857
      %s862 = scalar_lea.vmem %s3, 28
      %v863 = vld [vmem:[%s862] sm:$0xf]
      %v865 = vsel %vm386, %v863, 0
      %v868 = vsel %vm390, %v860, 0
      %v871 = vsel %vm390, %v861, 0
      %873 = vmatpush.msra.mxu0 0.0
      %874 = vmatpush.msra.mxu0 0.0
      %875 = vmatpush.msra.mxu0 0.0
      %876 = vmatpush.msra.mxu0 0.0
      %877 = vmatpush.msra.mxu0 0.0
      %878 = vmatpush.msra.mxu0 0.0
      %879 = vmatpush.msra.mxu0 0.0
      %880 = vmatpush.msra.mxu0 0.0
      %881 = vmatpush.msra.mxu0 0.0
      %882 = vmatpush.msra.mxu0 0.0
      %883 = vmatpush.msra.mxu0 0.0
      %884 = vmatpush.msra.mxu0 0.0
      %885 = vmatpush.msra.mxu0 0.0
      %886 = vmatpush.msra.mxu0 0.0
      %887 = vmatpush.msra.mxu0 0.0
      %888 = vmatpush.msra.mxu0 %v868
      %889 = vmatmul.f32.gmra.mxu0 %v865
      %v890 = vpop.f32.mrf.mxu0
      %v891 = vadd.f32 0.0, %v890
      %892 = vdwg.mxu0
      %893 = vmatpush.msra.mxu0 0.0
      %894 = vmatpush.msra.mxu0 0.0
      %895 = vmatpush.msra.mxu0 0.0
      %896 = vmatpush.msra.mxu0 0.0
      %897 = vmatpush.msra.mxu0 0.0
      %898 = vmatpush.msra.mxu0 0.0
      %899 = vmatpush.msra.mxu0 0.0
      %900 = vmatpush.msra.mxu0 0.0
      %901 = vmatpush.msra.mxu0 0.0
      %902 = vmatpush.msra.mxu0 0.0
      %903 = vmatpush.msra.mxu0 0.0
      %904 = vmatpush.msra.mxu0 0.0
      %905 = vmatpush.msra.mxu0 0.0
      %906 = vmatpush.msra.mxu0 0.0
      %907 = vmatpush.msra.mxu0 0.0
      %908 = vmatpush.msra.mxu0 %v871
      %909 = vmatmul.f32.gmra.mxu0 %v865
      %v910 = vpop.f32.mrf.mxu0
      %v911 = vadd.f32 0.0, %v910
      %912 = vdwg.mxu0
      %v913 = vadd.f32 %v841, %v891
      %v914 = vadd.f32 %v842, %v911
      %915 = vrot.lane.b32.xlu0 %v361, 111
      %v916 = vpop.permute.xlu0 %915
      %917 = vrot.lane.b32.xlu0 %v362, 111
      %v918 = vpop.permute.xlu0 %917
      %vm919 = vcmask 908288
      %v920 = vsel %vm919, %v916, %v918
      %v924 = vsel %vm919, %v918, %v916
      %s925 = scalar_lea.vmem %s4, 16
      %v926 = vld [vmem:[%s925] sm:$0x3]
      %v928 = vperm.slane %v926, 0
      %v929 = vperm.slane %v926, 1
      %v932 = vmul.f32 %v920, %v928
      %v933 = vmul.f32 %v924, %v929
      %s934 = scalar_lea.vmem %s3, 32
      %v935 = vld [vmem:[%s934] sm:$0xf]
      %v937 = vsel %vm386, %v935, 0
      %v940 = vsel %vm390, %v932, 0
      %v943 = vsel %vm390, %v933, 0
      %945 = vmatpush.msra.mxu0 0.0
      %946 = vmatpush.msra.mxu0 0.0
      %947 = vmatpush.msra.mxu0 0.0
      %948 = vmatpush.msra.mxu0 0.0
      %949 = vmatpush.msra.mxu0 0.0
      %950 = vmatpush.msra.mxu0 0.0
      %951 = vmatpush.msra.mxu0 0.0
      %952 = vmatpush.msra.mxu0 0.0
      %953 = vmatpush.msra.mxu0 0.0
      %954 = vmatpush.msra.mxu0 0.0
      %955 = vmatpush.msra.mxu0 0.0
      %956 = vmatpush.msra.mxu0 0.0
      %957 = vmatpush.msra.mxu0 0.0
      %958 = vmatpush.msra.mxu0 0.0
      %959 = vmatpush.msra.mxu0 0.0
      %960 = vmatpush.msra.mxu0 %v940
      %961 = vmatmul.f32.gmra.mxu0 %v937
      %v962 = vpop.f32.mrf.mxu0
      %v963 = vadd.f32 0.0, %v962
      %964 = vdwg.mxu0
      %965 = vmatpush.msra.mxu0 0.0
      %966 = vmatpush.msra.mxu0 0.0
      %967 = vmatpush.msra.mxu0 0.0
      %968 = vmatpush.msra.mxu0 0.0
      %969 = vmatpush.msra.mxu0 0.0
      %970 = vmatpush.msra.mxu0 0.0
      %971 = vmatpush.msra.mxu0 0.0
      %972 = vmatpush.msra.mxu0 0.0
      %973 = vmatpush.msra.mxu0 0.0
      %974 = vmatpush.msra.mxu0 0.0
      %975 = vmatpush.msra.mxu0 0.0
      %976 = vmatpush.msra.mxu0 0.0
      %977 = vmatpush.msra.mxu0 0.0
      %978 = vmatpush.msra.mxu0 0.0
      %979 = vmatpush.msra.mxu0 0.0
      %980 = vmatpush.msra.mxu0 %v943
      %981 = vmatmul.f32.gmra.mxu0 %v937
      %v982 = vpop.f32.mrf.mxu0
      %v983 = vadd.f32 0.0, %v982
      %984 = vdwg.mxu0
      %v985 = vadd.f32 %v913, %v963
      %v986 = vadd.f32 %v914, %v983
      %v987 = vld [vmem:[%s5] sm:$0xf]
      %989 = vset.pattern.permute.xlu0 0
      %990 = vperm.xlu0 %989, %v987
      %v991 = vpop.permute.xlu0 %990
      %v993 = vadd.f32 %v985, %v991
      %v994 = vadd.f32 %v986, %v991
      %v995 = vmax.f32 %v993, 0.0
      %v996 = vmax.f32 %v994, 0.0
      %v997 = vld [vmem:[%s6] sm:$0xff]
      %v998 = vld [vmem:[%s6 + $0x8] sm:$0xff]
      %v999 = vld [vmem:[%s7] sm:$0xff]
      %v1000 = vld [vmem:[%s7 + $0x8] sm:$0xff]
      %1002 = vset.pattern.permute.xlu0 0
      %1003 = vperm.xlu0 %1002, %v999
      %v1004 = vpop.permute.xlu0 %1003
      %1007 = vset.pattern.permute.xlu0 0
      %1008 = vperm.xlu0 %1007, %v1000
      %v1009 = vpop.permute.xlu0 %1008
      %v1012 = vsel %vm386, %v997, 0
      %v1015 = vsel %vm386, %v998, 0
      %v1018 = vsel %vm390, %v995, 0
      %v1021 = vsel %vm390, %v996, 0
      %1023 = vmatpush.msra.mxu0 0.0
      %1024 = vmatpush.msra.mxu0 0.0
      %1025 = vmatpush.msra.mxu0 0.0
      %1026 = vmatpush.msra.mxu0 0.0
      %1027 = vmatpush.msra.mxu0 0.0
      %1028 = vmatpush.msra.mxu0 0.0
      %1029 = vmatpush.msra.mxu0 0.0
      %1030 = vmatpush.msra.mxu0 0.0
      %1031 = vmatpush.msra.mxu0 0.0
      %1032 = vmatpush.msra.mxu0 0.0
      %1033 = vmatpush.msra.mxu0 0.0
      %1034 = vmatpush.msra.mxu0 0.0
      %1035 = vmatpush.msra.mxu0 0.0
      %1036 = vmatpush.msra.mxu0 0.0
      %1037 = vmatpush.msra.mxu0 0.0
      %1038 = vmatpush.msra.mxu0 %v1018
      %1039 = vmatmul.f32.gmra.mxu0 %v1012
      %v1040 = vpop.f32.mrf.mxu0
      %v1041 = vadd.f32 %v1004, %v1040
      %1042 = vmatmul.f32.gmra.mxu0 %v1015
      %v1043 = vpop.f32.mrf.mxu0
      %v1044 = vadd.f32 %v1009, %v1043
      %1045 = vdwg.mxu0
      %1046 = vmatpush.msra.mxu0 0.0
      %1047 = vmatpush.msra.mxu0 0.0
      %1048 = vmatpush.msra.mxu0 0.0
      %1049 = vmatpush.msra.mxu0 0.0
      %1050 = vmatpush.msra.mxu0 0.0
      %1051 = vmatpush.msra.mxu0 0.0
      %1052 = vmatpush.msra.mxu0 0.0
      %1053 = vmatpush.msra.mxu0 0.0
      %1054 = vmatpush.msra.mxu0 0.0
      %1055 = vmatpush.msra.mxu0 0.0
      %1056 = vmatpush.msra.mxu0 0.0
      %1057 = vmatpush.msra.mxu0 0.0
      %1058 = vmatpush.msra.mxu0 0.0
      %1059 = vmatpush.msra.mxu0 0.0
      %1060 = vmatpush.msra.mxu0 0.0
      %1061 = vmatpush.msra.mxu0 %v1021
      %1062 = vmatmul.f32.gmra.mxu0 %v1012
      %v1063 = vpop.f32.mrf.mxu0
      %v1064 = vadd.f32 %v1004, %v1063
      %1065 = vmatmul.f32.gmra.mxu0 %v1015
      %v1066 = vpop.f32.mrf.mxu0
      %v1067 = vadd.f32 %v1009, %v1066
      %1068 = vdwg.mxu0
      %v1069 = vmax.f32 %v1041, 0.0
      %v1070 = vmax.f32 %v1064, 0.0
      %v1071 = vmax.f32 %v1044, 0.0
      %v1072 = vmax.f32 %v1067, 0.0
      %v1073 = vadd.f32 %v1069, %v306
      %v1074 = vadd.f32 %v1070, %v307
      %v1075 = vadd.f32 %v1071, %v308
      %v1076 = vadd.f32 %v1072, %v309
      %v1077 = vmax.f32 %v1073, 0.0
      %v1078 = vmax.f32 %v1074, 0.0
      %v1079 = vmax.f32 %v1075, 0.0
      %v1080 = vmax.f32 %v1076, 0.0
      %1081 = vst [vmem:[%s305] sm:$0xff] %v1077
      %1082 = vst [vmem:[%s305 + $0x8] sm:$0xff] %v1078
      %1083 = vst [vmem:[%s305 + $0x10] sm:$0xff] %v1079
      %1084 = vst [vmem:[%s305 + $0x18] sm:$0xff] %v1080
      %p1085 = scmp.lt.s32.totalorder %s19, 1
      %s1086 = scalar_select %p1085, %s19, 1
      %s1087 = smul.addr %s1086, 4
      %s1088 = smul.addr %s1087, 8
      %s1089 = scalar_lea.vmem %s8, %s1088
      // Predicated region
      $region53: #{bottleneck_forward.1} parent=51 // pred_check
        %p1090 = pneg %p210
      $region54: #{bottleneck_forward.1} parent=51 // pred_check_branch
        %1092 = sbr.rel (%p1090) target = $region56
      $region55: #{bottleneck_forward.1} parent=51 // pred_region
        _
      $region56: #{bottleneck_forward.1} parent=51 // pred_fallthru
        _
    $region52: #{bottleneck_forward.1} parent=5 // pred_fallthru
      _
    %p1093 = scmp.le.s32.totalorder 2, %s14
    // Predicated region
    $region57: #{bottleneck_forward.1} parent=5 // pred_check
      %p1094 = pneg %p1093
    $region58: #{bottleneck_forward.1} parent=5 // pred_check_branch
      %1096 = sbr.rel (%p1094) target = $region60
    $region59: #{bottleneck_forward.1} parent=5 // pred_region
      %s1097 = ssub.s32 %s14, 2
      // Predicated region
      $region61: #{bottleneck_forward.1} parent=59 // pred_check
        %p1098 = pneg %p216
      $region62: #{bottleneck_forward.1} parent=59 // pred_check_branch
        %1100 = sbr.rel (%p1098) target = $region64
      $region63: #{bottleneck_forward.1} parent=59 // pred_region
        %p1101 = scmp.lt.s32.totalorder %s20, 1
        %s1102 = scalar_select %p1101, %s20, 1
        %s1103 = smul.addr %s1102, 4
        %s1104 = smul.addr %s1103, 8
        %s1105 = scalar_lea.vmem %s8, %s1104
      $region64: #{bottleneck_forward.1} parent=59 // pred_fallthru
        _
    $region60: #{bottleneck_forward.1} parent=5 // pred_fallthru
      _
  $region6: #{bottleneck_forward.1} parent=0 // loop_footer
    %s18 = sadd.s32 1, %s14
  $region7: #{bottleneck_forward.1} parent=0 // loop_footer_branch
    %13 = sbr.rel target = $region3
  $region8: #{bottleneck_forward.1} parent=0 // loop_exit
    _

</llo_original>
